<compile_context>
chip_gen: v6e
topology: v6e:2x2x1
jax: 0.10.0
libtpu: 0.0.40
codegen_flags: <defaults>
</compile_context>

<pallas_src>
import math

import jax
import jax.numpy as jnp
from jax.experimental import pallas as pl
from jax.experimental.pallas import tpu as pltpu


def _pe_kernel(coef_ref, o_ref):
    """o[r, c] = sin((row_start + r) * a[c] + b[c]), coef = [a; b] of shape (2, W)."""
    tile_rows, w = o_ref.shape
    a = coef_ref[0:1, :]                                   # (1, W)
    b = coef_ref[1:2, :]                                   # (1, W)
    row_start = (pl.program_id(0) * tile_rows).astype(jnp.float32)
    b_tile = row_start * a + b                             # fold tile offset into phase
    r = jax.lax.broadcasted_iota(jnp.int32, (tile_rows, w), 0).astype(jnp.float32)
    o_ref[...] = jnp.sin(r * a + b_tile).astype(o_ref.dtype)


def _choose_tile_rows(rows: int, width: int, itemsize: int) -> int:
    """Byte-sized tiles (~4 MiB) with an even grid-step count for v7x's 2 TCs."""
    sub = max(8, 32 // itemsize)                 # sublane multiple (8 f32 / 16 bf16)
    if rows <= sub:
        return rows                              # single full-extent block
    # <= ~4 MiB per tile => double-buffered output <= ~8 MiB, safely inside the
    # v5e 16 MiB scoped-VMEM default (v6e/v7x scoped defaults are >= 32 MiB).
    cap_rows = max(sub, ((4 << 20) // (width * itemsize)) // sub * sub)
    n_steps = max(2, pl.cdiv(rows, cap_rows))
    if n_steps % 2:                              # even work split across 2 TensorCores
        n_steps += 1
    tile = pl.cdiv(pl.cdiv(rows, n_steps), sub) * sub
    return int(min(tile, cap_rows))


def make_positional_embedding_table(max_len: int, d_model: int,
                                    tile_rows=None, dtype=jnp.float32):
    """Builds the [max_len, d_model] sinusoidal PE table with a Pallas kernel."""
    if d_model % 2 != 0:
        raise ValueError("d_model must be even for sine/cosine positional embeddings")
    if max_len >= (1 << 24):
        raise ValueError("max_len too large for exact float32 position indices")

    # Lane-dense packing: k consecutive positions per 128-lane output row.
    k = 128 // d_model if (d_model < 128 and 128 % d_model == 0) else 1
    rows, w = pl.cdiv(max_len, k), k * d_model

    # Single (2, W) coefficient slab, computed once outside the kernel:
    #   packed column c -> feature col = c % d_model, position p = r*k + c//d_model
    #   pe = sin(p * inv_freq[col] + phase[col]) = sin(r * a[c] + b[c])
    #     a[c] = k * inv_freq[col]
    #     b[c] = (c // d_model) * inv_freq[col] + (col % 2) * pi/2   (cos -> sin phase)
    c = jnp.arange(w, dtype=jnp.int32)
    col = c % d_model
    two_i = (2 * (col // 2)).astype(jnp.float32)
    inv_freq = jnp.exp(-(two_i / jnp.float32(d_model)) * jnp.float32(math.log(10000.0)))
    phase = (col % 2).astype(jnp.float32) * jnp.float32(math.pi / 2.0)
    a = jnp.float32(k) * inv_freq
    b = (c // d_model).astype(jnp.float32) * inv_freq + phase
    coef = jnp.stack([a, b], axis=0)                       # (2, W)

    itemsize = jnp.dtype(dtype).itemsize
    if tile_rows is None:
        tile_rows = _choose_tile_rows(rows, w, itemsize)

    pe_packed = pl.pallas_call(
        _pe_kernel,
        out_shape=jax.ShapeDtypeStruct((rows, w), dtype),   # no row padding
        grid_spec=pl.GridSpec(
            grid=(pl.cdiv(rows, tile_rows),),
            in_specs=[pl.BlockSpec((2, w), lambda i: (0, 0))],
            out_specs=pl.BlockSpec((tile_rows, w), lambda i: (i, 0)),
        ),
        compiler_params=pltpu.CompilerParams(
            dimension_semantics=("parallel",)),
    )(coef)

    # Undo packing: row-major reshape is a free view; slice only in the (rare)
    # ragged case where max_len is not a multiple of k.
    pe = pe_packed.reshape(rows * k, d_model)
    if rows * k != max_len:
        pe = pe[:max_len]
    return pe


class PositionalEmbedding:
    """JAX/Pallas equivalent of the PyTorch PositionalEmbedding module."""

    def __init__(self, d_model: int, max_len: int):
        # Deterministic buffer (no learned params); built once by the kernel.
        # TODO(synk): pass dtype=jnp.bfloat16 here if the downstream model is
        # bf16 -- halves HBM writeback on v5e (HBM-bound generation).
        self.pe = make_positional_embedding_table(max_len, d_model)

    def __call__(self, x):
        # x: [batch, seq_len, d_model]; returns pe[:seq_len, :] like forward().
        seq_len = x.shape[1]
        return self.pe[:seq_len, :]


def _reference_pe(max_len, d_model):
    pos = jnp.arange(max_len, dtype=jnp.float32)[:, None]
    _2i = jnp.arange(0, d_model, 2, dtype=jnp.float32)
    angle = pos / (10000.0 ** (_2i / d_model))
    pe = jnp.zeros((max_len, d_model), jnp.float32)
    pe = pe.at[:, 0::2].set(jnp.sin(angle))
    pe = pe.at[:, 1::2].set(jnp.cos(angle))
    return pe


if __name__ == "__main__":
    batch, seq_len, d_model, max_len = 2, 8, 32, 64

    key = jax.random.PRNGKey(0)
    x = jax.random.normal(key, (batch, seq_len, d_model), dtype=jnp.float32)

    module = PositionalEmbedding(d_model=d_model, max_len=max_len)
    out = jax.block_until_ready(module(x))

    assert out.shape == (seq_len, d_model), out.shape
    assert out.dtype == jnp.float32, out.dtype

    ref = _reference_pe(max_len, d_model)[:seq_len, :]
    assert jnp.allclose(out, ref, atol=2e-5, rtol=1e-5), "mismatch vs reference"

    # Extra coverage (tolerances loosened slightly: cos is computed as
    # sin(x + pi/2), which differs from cos(x) by a few ulps after f32 range
    # reduction for larger arguments).
    for ml, dm in [(256, 128),    # unpacked path (d_model >= 128)
                   (100, 64),     # packed path with ragged last grid block
                   (37, 64)]:     # packed path with max_len not a multiple of k
        pe = jax.block_until_ready(make_positional_embedding_table(ml, dm))
        assert pe.shape == (ml, dm), pe.shape
        refp = _reference_pe(ml, dm)
        assert jnp.allclose(pe, refp, atol=1e-4, rtol=1e-5), f"mismatch ({ml},{dm})"

    print("KERNEL_OK")
</pallas_src>

<mosaic_0001>
module attributes {stable_mosaic.version = 11 : i64} {
  func.func @_pe_kernel(%arg0: i32, %arg1: memref<2x128xf32, #tpu.memory_space<vmem>>, %arg2: memref<8x128xf32, #tpu.memory_space<vmem>>) attributes {dimension_semantics = [#tpu.dimension_semantics<parallel>], iteration_bounds = array<i64: 2>, scalar_prefetch = 0 : i64, scratch_operands = 0 : i64, tpu.core_type = #tpu.core_type<tc>, window_params = [{pipeline_mode = #tpu.pipeline_mode<synchronous>, transform_indices = @transform_0, window_bounds = array<i64: 2, 128>}, {transform_indices = @transform_1, window_bounds = array<i64: 8, 128>}]} {
    %c0 = arith.constant 0 : index
    %c0_0 = arith.constant 0 : index
    %0 = vector.load %arg1[%c0, %c0_0] : memref<2x128xf32, #tpu.memory_space<vmem>>, vector<1x128xf32>
    %c1 = arith.constant 1 : index
    %c0_1 = arith.constant 0 : index
    %1 = vector.load %arg1[%c1, %c0_1] : memref<2x128xf32, #tpu.memory_space<vmem>>, vector<1x128xf32>
    %c8_i32 = arith.constant 8 : i32
    %2 = arith.muli %arg0, %c8_i32 : i32
    %3 = arith.sitofp %2 : i32 to f32
    %4 = vector.broadcast %3 : f32 to vector<1x128xf32>
    %5 = arith.mulf %4, %0 : vector<1x128xf32>
    %6 = arith.addf %5, %1 : vector<1x128xf32>
    %7 = tpu.iota {dimensions = array<i32: 0>} : vector<8x128xi32>
    %8 = arith.sitofp %7 : vector<8x128xi32> to vector<8x128xf32>
    %9 = vector.broadcast %0 : vector<1x128xf32> to vector<8x128xf32>
    %10 = arith.mulf %8, %9 : vector<8x128xf32>
    %11 = vector.broadcast %6 : vector<1x128xf32> to vector<8x128xf32>
    %12 = arith.addf %10, %11 : vector<8x128xf32>
    %13 = math.sin %12 : vector<8x128xf32>
    %c0_2 = arith.constant 0 : index
    %c0_3 = arith.constant 0 : index
    %14 = vector.load %arg2[%c0_2, %c0_3] : memref<8x128xf32, #tpu.memory_space<vmem>>, vector<8x128xf32>
    tpu.vector_store %arg2[%c0_2, %c0_3], %13 {strides = array<i32>} : memref<8x128xf32, #tpu.memory_space<vmem>>, vector<8x128xf32>,
    return
  }
  func.func @transform_0(%arg0: i32) -> (i32, i32) {
    %c0_i32 = arith.constant 0 : i32
    %c0_i32_0 = arith.constant 0 : i32
    %c0_i32_1 = arith.constant 0 : i32
    return %c0_i32, %c0_i32_0 : i32, i32
  }
  func.func @transform_1(%arg0: i32) -> (i32, i32) {
    %c0_i32 = arith.constant 0 : i32
    %c0_i32_0 = arith.constant 0 : i32
    return %arg0, %c0_i32 : i32, i32
  }
}

</mosaic_0001>

<llo_original>
// kernel: tpu_custom_call.1
$region0: #{tpu_custom_call.1}
  #allocation0 [shape = 'u32[]', space=smem, size = 0x4, offset = 0x4, fixed_abs, tag = 'smem constant byte address 0x4 - core index']
  #allocation1 [shape = 'u32[144,128]{1,0:T(1,128)}', space=vmem, size = 0x12000, scoped, tag = 'internal scratch']
  %s0 = inlined_call_operand.hbm [shape: f32[2,128], index: 0, kind: input, shape index: {}]
  %s1 = inlined_call_operand.hbm [shape: f32[16,128], index: 1, kind: output, shape index: {}]
  %s2 = sld [smem:[#allocation0]]
  $region41: #{tpu_custom_call.1} parent=0
    _
  %s4 = ssub.s32 1, %s2
  %s5 = scalar_select 0, %s4, %s2
  $region1: #{tpu_custom_call.1} parent=0
    #allocation2 [shape = 'u8[1024]{0}', space=vmem, size = 0x400, scoped, tag = 'input window, operand 0, single buffered']
    #allocation3 [shape = 's32[2]{0}', space=sflag, size = 0x8, scoped, tag = 'scoped memory for tpu_custom_call.1']
    #allocation4 [shape = 's32[2]{0}', space=sflag, size = 0x8, scoped, tag = 'scoped memory for tpu_custom_call.1']
    #allocation5 [shape = 'u8[8192]{0}', space=vmem, size = 0x2000, scoped, tag = 'output window, operand 0']
    %6 = vsyncpa [#allocation3], 0
    %7 = vsyncpa [#allocation4], 0
    %s8 = scalar_lea.sflag [#allocation4], 1
    %9 = vsyncpa %s8, 0
    loop: start=0, step=1, limit=4
    $region2: #{tpu_custom_call.1} parent=1 // loop_pre_header
      _
    $region3: #{tpu_custom_call.1} parent=1 // loop_header
      %s11 = sphi 0, %s15
      %p12 = scmp.ge.s32.totalorder %s11, 4
      %s19 = sphi 0, %s19
      %s21 = sphi 0, %s19
      %s22 = sphi 0, %s21
      %s36 = sphi 0, %s22
      %s42 = sphi 0, %s44
      %s45 = sphi 0, %s42
      %s46 = sphi 0, %s45
      %s62 = sphi 0, %s46
    $region4: #{tpu_custom_call.1} parent=1 // loop_header_branch
      %14 = sbr.rel (%p12) target = $region8
    $region5: #{tpu_custom_call.1} parent=1 // loop_body
      %s16 = ssub.s32 %s11, 1
      %s17 = ssub.s32 %s11, 2
      %s18 = sadd.s32 %s11, 1
      %s20 = sadd.s32 %s19, 1
      %p23 = scmp.eq.s32.totalorder %s11, 1
      %p24 = scmp.ne.s32.totalorder %s19, %s21
      %p25 = scmp.eq.s32.totalorder %s11, 0
      %p26 = por %p24, %p25
      %p27 = scmp.ne.s32.totalorder %s19, %s21
      %p28 = scmp.eq.s32.totalorder %s16, 1
      %p29 = por %p27, %p28
      %p30 = scmp.ne.s32.totalorder %s21, %s22
      %p31 = scmp.eq.s32.totalorder %s16, 0
      %p32 = por %p30, %p31
      %p33 = scmp.ne.s32.totalorder %s21, %s22
      %p34 = scmp.eq.s32.totalorder %s17, 1
      %p35 = por %p33, %p34
      %p37 = scmp.ne.s32.totalorder %s22, %s36
      %p38 = scmp.eq.s32.totalorder %s17, 0
      %p39 = por %p37, %p38
      %s40 = ssub.s32 %s11, %s18
      %p41 = scmp.eq.s32.totalorder %s40, 0
      %s43 = sadd.s32 %s42, 1
      %s44 = scalar_select %p41, %s42, %s43
      %p47 = pneg %p41
      %p48 = scmp.eq.s32.totalorder %s11, 1
      %p49 = por %p47, %p48
      %p50 = scmp.ne.s32.totalorder %s42, %s45
      %p51 = scmp.eq.s32.totalorder %s11, 0
      %p52 = por %p50, %p51
      %p53 = scmp.ne.s32.totalorder %s42, %s45
      %p54 = scmp.eq.s32.totalorder %s16, 1
      %p55 = por %p53, %p54
      %p56 = scmp.ne.s32.totalorder %s45, %s46
      %p57 = scmp.eq.s32.totalorder %s16, 0
      %p58 = por %p56, %p57
      %p59 = scmp.ne.s32.totalorder %s45, %s46
      %p60 = scmp.eq.s32.totalorder %s17, 1
      %p61 = por %p59, %p60
      %p63 = scmp.ne.s32.totalorder %s46, %s62
      %p64 = scmp.eq.s32.totalorder %s17, 0
      %p65 = por %p63, %p64
      %p66 = scmp.le.s32.totalorder 1, %s11
      %p67 = scmp.lt.s32.totalorder %s11, 3
      %p68 = pnand %p66, %p67
      %p69 = pneg %p68
      // Predicated region
      $region9: #{tpu_custom_call.1} parent=5 // pred_check
        _
      $region10: #{tpu_custom_call.1} parent=5 // pred_check_branch
        %71 = sbr.rel (%p68) target = $region12
      $region11: #{tpu_custom_call.1} parent=5 // pred_region
        %s72 = ssub.s32 %s11, 1
        // Predicated region
        $region13: #{tpu_custom_call.1} parent=11 // pred_check
          %p73 = pneg %p32
        $region14: #{tpu_custom_call.1} parent=11 // pred_check_branch
          %75 = sbr.rel (%p73) target = $region16
        $region15: #{tpu_custom_call.1} parent=11 // pred_region
          %s77 = ssub.s32 32, 32
          %78 = vsyncadd [#allocation3], %s77
          %s80 = sshll.u32 [#allocation2], 4
          %s81 = int_to_ptr.vmem [resolvable:$true] %s80
          %83 = dma.hbm_to_vmem [thread:$0]  %s0, 32, %s81, [#allocation3]
        $region16: #{tpu_custom_call.1} parent=11 // pred_fallthru
          _
      $region12: #{tpu_custom_call.1} parent=5 // pred_fallthru
        _
      %p84 = scmp.lt.s32.totalorder %s11, 2
      // Predicated region
      $region17: #{tpu_custom_call.1} parent=5 // pred_check
        %p85 = pneg %p84
      $region18: #{tpu_custom_call.1} parent=5 // pred_check_branch
        %87 = sbr.rel (%p85) target = $region20
      $region19: #{tpu_custom_call.1} parent=5 // pred_region
        _
      $region20: #{tpu_custom_call.1} parent=5 // pred_fallthru
        _
      %p88 = scmp.le.s32.totalorder 1, %s11
      %p89 = scmp.lt.s32.totalorder %s11, 3
      %p90 = pnand %p88, %p89
      %p91 = pneg %p90
      // Predicated region
      $region21: #{tpu_custom_call.1} parent=5 // pred_check
        _
      $region22: #{tpu_custom_call.1} parent=5 // pred_check_branch
        %93 = sbr.rel (%p90) target = $region24
      $region23: #{tpu_custom_call.1} parent=5 // pred_region
        %s94 = ssub.s32 %s11, 1
        // Predicated region
        $region25: #{tpu_custom_call.1} parent=23 // pred_check
          %p95 = pneg %p32
        $region26: #{tpu_custom_call.1} parent=23 // pred_check_branch
          %97 = sbr.rel (%p95) target = $region28
        $region27: #{tpu_custom_call.1} parent=23 // pred_region
          %98 = dma.done [#allocation3], 32
        $region28: #{tpu_custom_call.1} parent=23 // pred_fallthru
          _
        %p99 = pneg %p32
        %p100 = pneg %p29
        %p101 = pneg %p58
        %p102 = pneg %p55
        %s103 = sand.u32 %s45, 1
        %s104 = scalar_lea.sflag [#allocation4], %s103
        %s105 = sand.u32 %s45, 1
        %s106 = smul.addr %s105, 8
        %s107 = scalar_lea.vmem [#allocation5], %s106
        %v108 = vld [vmem:[#allocation2] sm:$0x1]
        %v109 = vld [vmem:[#allocation2 + $0x1] sm:$0x1]
        %s110 = smul.u32 %s16, 8
        %s111 = scvt.s32.f32 %s110
        %v112 = vstv %s111
        %v113 = vmul.f32 %v112, %v108
        %v114 = vadd.f32 %v113, %v109
        %v115 = vlaneseq
        %v116 = vshrl.u32 %v115, 7
        %v117 = vcvt.s32.f32 %v116
        %v118 = vlaneseq
        %v119 = vshrl.u32 %v118, 7
        %v120 = vsub.s32 0, %v119
        %v121 = vrot.slane %v108, %v120
        %v122 = vmul.f32 %v117, %v121
        %v123 = vlaneseq
        %v124 = vshrl.u32 %v123, 7
        %v125 = vsub.s32 0, %v124
        %v126 = vrot.slane %v114, %v125
        %v127 = vadd.f32 %v122, %v126
        %v128 = vand.u32 2147483647, %v127
        %vm129 = vcmp.le.f32.partialorder %v128, 0.7853982
        %vm130 = vcmp.lt.s32.totalorder %v127, 0
        %v131 = vand.u32 %v127, 2139095040
        %v132 = vshrl.u32 %v131, 23
        %v133 = vsub.s32 %v132, 127
        %v134 = vand.u32 2147483647, %v127
        %v135 = vand.u32 %v134, 8388607
        %v136 = vor.u32 %v135, 8388608
        %v137 = vsub.s32 0, %v136
        %v138 = vadd.s32 %v133, 1
        %vm139 = vcmp.gt.s32.totalorder %v138, 0
        %v140 = vsel %vm139, %v138, 0
        %v141 = vshrl.u32 %v140, 5
        %v142 = vand.u32 %v140, 31
        %v143 = vsub.s32 32, %v142
        %v144 = vshrl.u32 683565275, %v143
        %v145 = vshll.u32 683565275, %v142
        %v146 = vshrl.u32 2475754826, %v143
        %v147 = vor.u32 %v145, %v146
        %v148 = vshll.u32 2475754826, %v142
        %v149 = vshrl.u32 2131351028, %v143
        %v150 = vor.u32 %v148, %v149
        %v151 = vshll.u32 2131351028, %v142
        %v152 = vshrl.u32 2102212464, %v143
        %v153 = vor.u32 %v151, %v152
        %v154 = vshll.u32 2102212464, %v142
        %v155 = vshrl.u32 920167782, %v143
        %v156 = vor.u32 %v154, %v155
        %v157 = vshll.u32 920167782, %v142
        %v158 = vshrl.u32 1326507024, %v143
        %v159 = vor.u32 %v157, %v158
        %vm160 = vcmp.lt.s32.totalorder %v141, 1
        %vm161 = vcmp.lt.s32.totalorder %v141, 2
        %vm162 = vcmp.lt.s32.totalorder %v141, 3
        %vm163 = vcmp.lt.s32.totalorder %v141, 4
        %v164 = vsel %vm160, %v144, %v147
        %v165 = vsel %vm163, %v153, 2102212464
        %v166 = vsel %vm162, %v150, %v165
        %v167 = vsel %vm161, %v164, %v166
        %v168 = vsel %vm160, %v147, %v150
        %v169 = vsel %vm163, %v156, 920167782
        %v170 = vsel %vm162, %v153, %v169
        %v171 = vsel %vm161, %v168, %v170
        %v172 = vsel %vm160, %v150, %v153
        %v173 = vsel %vm163, %v159, 1326507024
        %v174 = vsel %vm162, %v156, %v173
        %v175 = vsel %vm161, %v172, %v174
        %v176 = vshll.u32 %v136, 8
        %v177 = vmul.u32.u64.compose %v176, %v175
        %v178 = vextract.low.u32 %v177
        %v179 = vextract.high.u32 %v177
        %v180 = vmul.u32.u64.compose %v176, %v171
        %v181 = vextract.low.u32 %v180
        %v182 = vextract.high.u32 %v180
        %v183 = vmul.u32 %v176, %v167
        %v184 = vadd.s32 %v179, %v181
        %vm185 = vc.u32 %v179, %v181
        %v186 = vadd.s32 %v182, 1
        %v187 = vsel %vm185, %v186, %v182
        %v188 = vadd.s32 %v183, %v187
        %v189 = vadd.s32 %v188, 536870912
        %v190 = vshrl.u32 %v189, 30
        %v191 = vshll.u32 %v190, 30
        %v192 = vsub.s32 %v188, %v191
        %vm193 = vcmp.lt.s32.totalorder %v192, 0
        %v194 = vsub.s32 0, %v192
        %v195 = vsel %vm193, %v194, %v192
        %v196 = vclz %v195
        %v197 = vsub.s32 %v196, 2
        %vm198 = vcmp.gt.s32.totalorder 0, %v197
        %v199 = vsel %vm198, 0, %v197
        %v200 = vsub.s32 32, %v199
        %v201 = vshll.u32 %v192, %v199
        %v202 = vshrl.u32 %v184, %v200
        %v203 = vor.u32 %v201, %v202
        %v204 = vsub.s32 4294967266, %v199
        %v205 = vadd.s32 %v204, 127
        %v206 = vshll.u32 %v205, 23
        %v207 = vor.u32 4788187, %v206
        %v208 = vand.u32 2147483647, %v207
        %v210 = vcvt.s32.f32 %v203
        %v211 = vmul.f32 %v210, %v208
        %v212 = vxor.u32 %v211, 2147483648
        %v213 = vsel %vm130, %v212, %v211
        %v214 = vsub.s32 4, %v190
        %v215 = vsel %vm130, %v214, %v190
        %v216 = vsel %vm129, %v127, %v213
        %v217 = vsel %vm129, 0, %v215
        %v218 = vcosq.f32.pop %v216
        %v219 = vsinq.f32.pop %v216
        %vm220 = vweird.f32 %v127
        %v221 = vadd.s32 %v217, 3
        %v222 = vand.u32 %v221, 3
        %vm223 = vcmp.lt.s32.totalorder %v222, 2
        %vm224 = vcmp.eq.s32.totalorder %v222, 0
        %v225 = vxor.u32 %v219, 2147483648
        %v226 = vsel %vm224, %v218, %v225
        %vm227 = vcmp.eq.s32.totalorder %v222, 2
        %v228 = vxor.u32 %v218, 2147483648
        %v229 = vsel %vm227, %v228, %v219
        %v230 = vsel %vm223, %v226, %v229
        %v231 = vsel %vm220, nan, %v230
        %232 = vst [vmem:[%s107] sm:$0xff] %v231
        %s233 = sand.u32 %s45, 1
        %s234 = scalar_lea.sflag [#allocation4], %s233
        %s235 = sand.u32 %s45, 1
        %s236 = smul.addr %s235, 8
        %s237 = scalar_lea.vmem [#allocation5], %s236
        // Predicated region
        $region29: #{tpu_custom_call.1} parent=23 // pred_check
          %p238 = pneg %p55
        $region30: #{tpu_custom_call.1} parent=23 // pred_check_branch
          %240 = sbr.rel (%p238) target = $region32
        $region31: #{tpu_custom_call.1} parent=23 // pred_region
          %s242 = ssub.s32 128, 128
          %243 = vsyncadd %s234, %s242
          %s244 = smul.addr %s16, 128
          %s245 = scalar_lea.hbm %s1, %s244
          %s247 = sshll.u32 %s237, 4
          %s248 = int_to_ptr.vmem [resolvable:$true] %s247
          %250 = dma.vmem_to_hbm [thread:$0]  %s248, 128, %s245, %s234
        $region32: #{tpu_custom_call.1} parent=23 // pred_fallthru
          _
      $region24: #{tpu_custom_call.1} parent=5 // pred_fallthru
        _
      %p251 = scmp.le.s32.totalorder 2, %s11
      // Predicated region
      $region33: #{tpu_custom_call.1} parent=5 // pred_check
        %p252 = pneg %p251
      $region34: #{tpu_custom_call.1} parent=5 // pred_check_branch
        %254 = sbr.rel (%p252) target = $region36
      $region35: #{tpu_custom_call.1} parent=5 // pred_region
        %s255 = ssub.s32 %s11, 2
        // Predicated region
        $region37: #{tpu_custom_call.1} parent=35 // pred_check
          %p256 = pneg %p61
        $region38: #{tpu_custom_call.1} parent=35 // pred_check_branch
          %258 = sbr.rel (%p256) target = $region40
        $region39: #{tpu_custom_call.1} parent=35 // pred_region
          %s259 = sand.u32 %s46, 1
          %s260 = scalar_lea.sflag [#allocation4], %s259
          %s261 = sand.u32 %s46, 1
          %s262 = smul.addr %s261, 8
          %s263 = scalar_lea.vmem [#allocation5], %s262
          %264 = dma.done %s260, 128
        $region40: #{tpu_custom_call.1} parent=35 // pred_fallthru
          _
      $region36: #{tpu_custom_call.1} parent=5 // pred_fallthru
        _
    $region6: #{tpu_custom_call.1} parent=1 // loop_footer
      %s15 = sadd.s32 1, %s11
    $region7: #{tpu_custom_call.1} parent=1 // loop_footer_branch
      %10 = sbr.rel target = $region3
    $region8: #{tpu_custom_call.1} parent=1 // loop_exit
      _
    %265 = vsyncpa [#allocation3], 1
    %s266 = scalar_lea.sflag [#allocation3], 1
    %267 = vsyncpa %s266, 1
    %268 = vsyncpa [#allocation4], 1
    %s269 = scalar_lea.sflag [#allocation4], 1
    %270 = vsyncpa %s269, 1

</llo_original>
